<compile_context>
chip_gen: v7x
topology: tpu7x:2x2x1
jax: 0.10.0
libtpu: 0.0.40
codegen_flags: <defaults>
</compile_context>

<pallas_src>
import numpy as np
import jax
import jax.numpy as jnp
from jax.experimental import pallas as pl
from jax.experimental.pallas import tpu as pltpu


_VMEM_TILE_BUDGET = 12 * 1024 * 1024   # bytes for the double-buffered per-step working set
_LANE = 128


def _build_pe_table(d_model: int, max_len: int = 5000) -> jnp.ndarray:
    """Replicates the torch buffer: pe shape (max_len, 1, d_model), float32."""
    position = np.arange(0, max_len, dtype=np.float32)[:, None]              # (max_len, 1)
    div_term = np.exp(
        np.arange(0, d_model, 2, dtype=np.float32) * (-np.log(10000.0) / d_model)
    )                                                                        # (d_model/2,)
    pe = np.zeros((max_len, d_model), dtype=np.float32)
    pe[:, 0::2] = np.sin(position * div_term)
    pe[:, 1::2] = np.cos(position * div_term)
    return jnp.asarray(pe[:, None, :])                                       # (max_len, 1, d_model)


def _add_bcast_kernel(x_ref, pe_ref, o_ref):
    # x_ref: (tS, B, D); pe_ref: (tS, 1, D) -> broadcast-add over the batch axis.
    o_ref[...] = (x_ref[...] + pe_ref[...]).astype(o_ref.dtype)


def _add_flat_kernel(x_ref, pe_ref, o_ref):
    # Lane-dense elementwise add: all refs are (tR, 128).
    o_ref[...] = (x_ref[...] + pe_ref[...]).astype(o_ref.dtype)


def _compiler_params():
    return pltpu.CompilerParams(
        dimension_semantics=("parallel",),       # no reduction axis; shard across cores
        vmem_limit_bytes=32 * 1024 * 1024,
    )


def _pe_add_3d(x, pe, in_place):
    """Main path (d_model a multiple of 128): tile over seq, broadcast pe in-kernel."""
    S, B, D = x.shape
    itemsize = x.dtype.itemsize
    # Per seq-row, double-buffered: x tile + out tile (B*D each) + pe tile (D).
    bytes_per_seq_row = 2 * itemsize * (2 * B * D + D)
    tS = int(max(1, min(S, _VMEM_TILE_BUDGET // bytes_per_seq_row)))

    cost = pl.CostEstimate(
        flops=S * B * D,
        transcendentals=0,
        bytes_accessed=(2 * S * B * D + S * D) * itemsize,
    )
    return pl.pallas_call(
        _add_bcast_kernel,
        out_shape=jax.ShapeDtypeStruct((S, B, D), x.dtype),
        grid_spec=pltpu.PrefetchScalarGridSpec(
            num_scalar_prefetch=0,
            grid=(pl.cdiv(S, tS),),
            in_specs=[
                pl.BlockSpec((tS, B, D), lambda i: (i, 0, 0)),
                pl.BlockSpec((tS, 1, D), lambda i: (i, 0, 0)),
            ],
            out_specs=pl.BlockSpec((tS, B, D), lambda i: (i, 0, 0)),
        ),
        compiler_params=_compiler_params(),
        cost_estimate=cost,
        input_output_aliases={0: 0} if in_place else {},
    )(x, pe)


def _pe_add_flat(x, pe, in_place):
    """Lane-dense fallback for small / non-128-multiple d_model.

    Broadcast pe over batch in the wrapper (tiny for these shapes), flatten
    everything to (N/128, 128) so stores are full-width unmasked vst.
    """
    S, B, D = x.shape
    itemsize = x.dtype.itemsize
    total = S * B * D
    R = total // _LANE

    x2 = x.reshape(R, _LANE)
    pe2 = jnp.broadcast_to(pe, (S, B, D)).reshape(R, _LANE)

    bytes_per_row = 6 * _LANE * itemsize               # 3 operands x 2 buffers
    tR = int(max(1, min(R, _VMEM_TILE_BUDGET // bytes_per_row)))
    if tR < R:
        tR = max(8, (tR // 8) * 8)                      # satisfy (8,128) block tiling

    cost = pl.CostEstimate(
        flops=total,
        transcendentals=0,
        bytes_accessed=3 * total * itemsize,
    )
    out2 = pl.pallas_call(
        _add_flat_kernel,
        out_shape=jax.ShapeDtypeStruct((R, _LANE), x.dtype),
        grid_spec=pltpu.PrefetchScalarGridSpec(
            num_scalar_prefetch=0,
            grid=(pl.cdiv(R, tR),),
            in_specs=[
                pl.BlockSpec((tR, _LANE), lambda i: (i, 0)),
                pl.BlockSpec((tR, _LANE), lambda i: (i, 0)),
            ],
            out_specs=pl.BlockSpec((tR, _LANE), lambda i: (i, 0)),
        ),
        compiler_params=_compiler_params(),
        cost_estimate=cost,
        input_output_aliases={0: 0} if in_place else {},
    )(x2, pe2)
    return out2.reshape(S, B, D)


def positional_encoding_forward(x: jnp.ndarray, pe_full: jnp.ndarray, *, in_place: bool = False):
    """x: (seq_len, batch, d_model); pe_full: (max_len, 1, d_model) f32 buffer.

    Set in_place=True (when the caller no longer needs x) to alias the input
    HBM buffer with the output via input_output_aliases.
    """
    S, B, D = x.shape
    pe = pe_full[:S].astype(x.dtype)                    # glue: static slice + dtype match
    if D % _LANE != 0 and (S * B * D) % _LANE == 0:
        return _pe_add_flat(x, pe, in_place)
    return _pe_add_3d(x, pe, in_place)


if __name__ == "__main__":
    key = jax.random.PRNGKey(0)
    k1, k2 = jax.random.split(key)

    max_len = 64

    # Toy shapes implied by the module (seq-first): exercises the lane-dense flat path.
    seq_len, batch, d_model = 8, 2, 32
    pe_full = _build_pe_table(d_model, max_len=max_len)
    x = jax.random.normal(k1, (seq_len, batch, d_model), dtype=jnp.float32)
    out = jax.block_until_ready(positional_encoding_forward(x, pe_full))
    ref = x + pe_full[:seq_len]
    np.testing.assert_allclose(np.asarray(out), np.asarray(ref), rtol=1e-6, atol=1e-6)

    # Lane-aligned d_model: exercises the tiled 3-D broadcast path.
    d_model2 = 128
    pe_full2 = _build_pe_table(d_model2, max_len=max_len)
    x2 = jax.random.normal(k2, (seq_len, batch, d_model2), dtype=jnp.float32)
    out2 = jax.block_until_ready(positional_encoding_forward(x2, pe_full2))
    ref2 = x2 + pe_full2[:seq_len]
    np.testing.assert_allclose(np.asarray(out2), np.asarray(ref2), rtol=1e-6, atol=1e-6)

    # bf16 activations: pe is pre-cast to x.dtype inside the wrapper.
    x3 = x2.astype(jnp.bfloat16)
    out3 = jax.block_until_ready(positional_encoding_forward(x3, pe_full2))
    ref3 = x3 + pe_full2[:seq_len].astype(jnp.bfloat16)
    np.testing.assert_allclose(
        np.asarray(out3, dtype=np.float32),
        np.asarray(ref3, dtype=np.float32),
        rtol=1e-2, atol=1e-2,
    )

    print("KERNEL_OK")
</pallas_src>

<mosaic_0001>
module attributes {stable_mosaic.version = 11 : i64} {
  func.func @_add_flat_kernel(%arg0: i32, %arg1: memref<4x128xf32, #tpu.memory_space<vmem>>, %arg2: memref<4x128xf32, #tpu.memory_space<vmem>>, %arg3: memref<4x128xf32, #tpu.memory_space<vmem>>) attributes {dimension_semantics = [#tpu.dimension_semantics<parallel>], iteration_bounds = array<i64: 1>, scalar_prefetch = 0 : i64, scratch_operands = 0 : i64, tpu.core_type = #tpu.core_type<tc>, window_params = [{transform_indices = @transform_0, window_bounds = array<i64: 4, 128>}, {transform_indices = @transform_1, window_bounds = array<i64: 4, 128>}, {transform_indices = @transform_2, window_bounds = array<i64: 4, 128>}]} {
    %c0 = arith.constant 0 : index
    %c0_0 = arith.constant 0 : index
    %0 = vector.load %arg1[%c0, %c0_0] : memref<4x128xf32, #tpu.memory_space<vmem>>, vector<4x128xf32>
    %c0_1 = arith.constant 0 : index
    %c0_2 = arith.constant 0 : index
    %1 = vector.load %arg2[%c0_1, %c0_2] : memref<4x128xf32, #tpu.memory_space<vmem>>, vector<4x128xf32>
    %2 = arith.addf %0, %1 : vector<4x128xf32>
    %c0_3 = arith.constant 0 : index
    %c0_4 = arith.constant 0 : index
    %3 = vector.load %arg3[%c0_3, %c0_4] : memref<4x128xf32, #tpu.memory_space<vmem>>, vector<4x128xf32>
    tpu.vector_store %arg3[%c0_3, %c0_4], %2 {strides = array<i32>} : memref<4x128xf32, #tpu.memory_space<vmem>>, vector<4x128xf32>,
    return
  }
  func.func @transform_0(%arg0: i32) -> (i32, i32) {
    %c0_i32 = arith.constant 0 : i32
    %c0_i32_0 = arith.constant 0 : i32
    return %arg0, %c0_i32 : i32, i32
  }
  func.func @transform_1(%arg0: i32) -> (i32, i32) {
    %c0_i32 = arith.constant 0 : i32
    %c0_i32_0 = arith.constant 0 : i32
    return %arg0, %c0_i32 : i32, i32
  }
  func.func @transform_2(%arg0: i32) -> (i32, i32) {
    %c0_i32 = arith.constant 0 : i32
    %c0_i32_0 = arith.constant 0 : i32
    return %arg0, %c0_i32 : i32, i32
  }
}

</mosaic_0001>

<llo_original>
// kernel: tpu_custom_call.1
$region0: #{tpu_custom_call.1}
  #allocation0 [shape = 'u32[]', space=smem, size = 0x4, offset = 0x4, fixed_abs, tag = 'smem constant byte address 0x4 - core index']
  #allocation1 [shape = 'u32[144,128]{1,0:T(1,128)}', space=vmem, size = 0x12000, scoped, tag = 'internal scratch']
  %s0 = inlined_call_operand.hbm [shape: f32[4,128], index: 0, kind: input, shape index: {}]
  %s1 = inlined_call_operand.hbm [shape: f32[4,128], index: 1, kind: input, shape index: {}]
  %s2 = inlined_call_operand.hbm [shape: f32[4,128], index: 2, kind: output, shape index: {}]
  %s3 = sld [smem:[#allocation0]]
  $region26: #{tpu_custom_call.1} parent=0
    _
  %s5 = ssub.s32 1, %s3
  %s6 = scalar_select 0, %s5, %s3
  $region1: #{tpu_custom_call.1} parent=0
    #allocation2 [shape = 'u8[2048]{0}', space=vmem, size = 0x800, scoped, tag = 'input window, operand 0, single buffered']
    #allocation3 [shape = 's32[1]{0}', space=sflag, size = 0x4, scoped, tag = 'scoped memory for tpu_custom_call.1']
    #allocation4 [shape = 's32[1]{0}', space=sflag, size = 0x4, scoped, tag = 'scoped memory for tpu_custom_call.1']
    #allocation5 [shape = 'u8[2048]{0}', space=vmem, size = 0x800, scoped, tag = 'input window, operand 1, single buffered']
    #allocation6 [shape = 's32[1]{0}', space=sflag, size = 0x4, scoped, tag = 'scoped memory for tpu_custom_call.1']
    #allocation7 [shape = 'u8[2048]{0}', space=vmem, size = 0x800, scoped, tag = 'output window, operand 0, single buffered']
    %7 = vsyncpa [#allocation3], 0
    %8 = vsyncpa [#allocation6], 0
    %9 = vsyncpa [#allocation4], 0
    // Predicated region
    $region2: #{tpu_custom_call.1} parent=1 // pred_check
      _
    $region3: #{tpu_custom_call.1} parent=1 // pred_check_branch
      %11 = sbr.rel (0) target = $region5
    $region4: #{tpu_custom_call.1} parent=1 // pred_region
      %s13 = ssub.s32 64, 64
      %14 = vsyncadd [#allocation3], %s13
      %s16 = sshll.u32 [#allocation2], 4
      %s17 = int_to_ptr.vmem [resolvable:$true] %s16
      %19 = dma.hbm_to_vmem [thread:$0]  %s0, 64, %s17, [#allocation3]
    $region5: #{tpu_custom_call.1} parent=1 // pred_fallthru
      _
    // Predicated region
    $region6: #{tpu_custom_call.1} parent=1 // pred_check
      _
    $region7: #{tpu_custom_call.1} parent=1 // pred_check_branch
      %21 = sbr.rel (0) target = $region9
    $region8: #{tpu_custom_call.1} parent=1 // pred_region
      %s23 = ssub.s32 64, 64
      %24 = vsyncadd [#allocation6], %s23
      %s26 = sshll.u32 [#allocation5], 4
      %s27 = int_to_ptr.vmem [resolvable:$true] %s26
      %29 = dma.hbm_to_vmem [thread:$0]  %s1, 64, %s27, [#allocation6]
    $region9: #{tpu_custom_call.1} parent=1 // pred_fallthru
      _
    // Predicated region
    $region10: #{tpu_custom_call.1} parent=1 // pred_check
      _
    $region11: #{tpu_custom_call.1} parent=1 // pred_check_branch
      %31 = sbr.rel (0) target = $region13
    $region12: #{tpu_custom_call.1} parent=1 // pred_region
      %32 = dma.done [#allocation3], 64
    $region13: #{tpu_custom_call.1} parent=1 // pred_fallthru
      _
    // Predicated region
    $region14: #{tpu_custom_call.1} parent=1 // pred_check
      _
    $region15: #{tpu_custom_call.1} parent=1 // pred_check_branch
      %34 = sbr.rel (0) target = $region17
    $region16: #{tpu_custom_call.1} parent=1 // pred_region
      %35 = dma.done [#allocation6], 64
    $region17: #{tpu_custom_call.1} parent=1 // pred_fallthru
      _
    %v36 = vld [vmem:[#allocation2] sm:$0xf]
    %v37 = vld [vmem:[#allocation5] sm:$0xf]
    %v38 = vadd.f32 %v36, %v37
    %39 = vst [vmem:[#allocation7] sm:$0xf] %v38
    // Predicated region
    $region18: #{tpu_custom_call.1} parent=1 // pred_check
      _
    $region19: #{tpu_custom_call.1} parent=1 // pred_check_branch
      %41 = sbr.rel (0) target = $region21
    $region20: #{tpu_custom_call.1} parent=1 // pred_region
      %s43 = ssub.s32 64, 64
      %44 = vsyncadd [#allocation4], %s43
      %s46 = sshll.u32 [#allocation7], 4
      %s47 = int_to_ptr.vmem [resolvable:$true] %s46
      %49 = dma.vmem_to_hbm [thread:$0]  %s47, 64, %s2, [#allocation4]
    $region21: #{tpu_custom_call.1} parent=1 // pred_fallthru
      _
    // Predicated region
    $region22: #{tpu_custom_call.1} parent=1 // pred_check
      _
    $region23: #{tpu_custom_call.1} parent=1 // pred_check_branch
      %51 = sbr.rel (0) target = $region25
    $region24: #{tpu_custom_call.1} parent=1 // pred_region
      %52 = dma.done [#allocation4], 64
    $region25: #{tpu_custom_call.1} parent=1 // pred_fallthru
      _
    %53 = vsyncpa [#allocation3], 1
    %54 = vsyncpa [#allocation6], 1
    %55 = vsyncpa [#allocation4], 1

</llo_original>
